<compile_context>
chip_gen: v7x
topology: tpu7x:2x2x1
jax: 0.10.0
libtpu: 0.0.40
codegen_flags: <defaults>
</compile_context>

<pallas_src>
import functools

import jax
import jax.numpy as jnp
from jax import lax
from jax.experimental import pallas as pl
from jax.experimental.pallas import tpu as pltpu

EPS = 1e-5


# ---------------------------------------------------------------------------
# Fast path: one channel tile owns the full (N, H*W) extent, so the mean/var
# reduction and the fused a*x+b normalize happen on a single HBM read and a
# single HBM write of the tensor.
# ---------------------------------------------------------------------------
def _bn_onepass_kernel(x_ref, g_ref, b_ref, o_ref, *, inv_count):
    # x_ref: (N, TC, HW)   g_ref/b_ref: (1, TC, 1)   o_ref: (N, TC, HW)
    x = x_ref[...].astype(jnp.float32)                 # no-op for f32 inputs
    s1 = jnp.sum(x, axis=(0, 2), keepdims=True)        # (1, TC, 1)
    s2 = jnp.sum(x * x, axis=(0, 2), keepdims=True)    # (1, TC, 1)
    mean = s1 * inv_count
    var = jnp.maximum(s2 * inv_count - mean * mean, 0.0)   # cancellation guard
    inv = lax.rsqrt(var + EPS)
    scale = inv * g_ref[...]
    shift = b_ref[...] - mean * scale
    o_ref[...] = (x * scale + shift).astype(o_ref.dtype)


# ---------------------------------------------------------------------------
# Fallback (very large N*H*W): two-phase with a spatial grid axis.
#   pass 1: per-channel sum / sum-of-squares accumulated into resident output
#           blocks (init at hw step 0, reduction axis is the last grid axis)
#   pass 2: fused scale/shift apply
# ---------------------------------------------------------------------------
def _bn_stats_kernel(x_ref, s1_ref, s2_ref, *, tile_hw, hw):
    h = pl.program_id(1)

    @pl.when(h == 0)
    def _():
        s1_ref[...] = jnp.zeros_like(s1_ref)
        s2_ref[...] = jnp.zeros_like(s2_ref)

    x = x_ref[...].astype(jnp.float32)
    # Mask the ragged spatial tail (OOB lanes of the last block are garbage).
    lane = lax.broadcasted_iota(jnp.int32, x.shape, dimension=2)
    x = jnp.where(h * tile_hw + lane < hw, x, 0.0)
    s1_ref[...] += jnp.sum(x, axis=(0, 2), keepdims=True)
    s2_ref[...] += jnp.sum(x * x, axis=(0, 2), keepdims=True)


def _bn_apply_kernel(x_ref, scale_ref, shift_ref, o_ref):
    o_ref[...] = (x_ref[...].astype(jnp.float32) * scale_ref[...]
                  + shift_ref[...]).astype(o_ref.dtype)


# ---------------------------------------------------------------------------
# Generation-aware budgets and tile selection.
# ---------------------------------------------------------------------------
@functools.lru_cache(maxsize=None)
def _chip_info():
    vmem_cap = None
    try:
        vmem_cap = int(pltpu.get_tpu_info().vmem_capacity_bytes)
    except Exception:
        vmem_cap = None
    kind = ""
    try:
        kind = jax.devices()[0].device_kind.lower()
    except Exception:
        pass
    if vmem_cap is None:
        # Conservative unless we can tell it's a 128-MiB-VMEM part.
        big = any(tag in kind for tag in ("v5 lite", "v5e", "v6"))
        vmem_cap = (128 * 2**20) if big else (64 * 2**20)
    multi_tc = ("v7" in kind) or (vmem_cap <= 64 * 2**20)
    return vmem_cap, multi_tc


def _budgets():
    vmem_cap, multi_tc = _chip_info()
    small_vmem = vmem_cap <= 64 * 2**20
    block_budget = (6 * 2**20) if small_vmem else (24 * 2**20)   # one x block
    vmem_ceiling = (52 * 2**20) if small_vmem else (100 * 2**20)
    return block_budget, vmem_ceiling, multi_tc


def _pick_tile_c(n, c, hw, block_budget, multi_tc):
    """Largest multiple-of-8 divisor of C whose (N, tile_c, HW) block fits."""
    bytes_per_chan = n * hw * 4
    cands = sorted((d for d in range(8, c + 1, 8) if c % d == 0), reverse=True)
    fitting = [d for d in cands if d * bytes_per_chan <= block_budget]
    if not fitting:
        return None
    if multi_tc:
        # Prefer an even grid step count so the two TensorCores split evenly.
        even = [d for d in fitting if (c // d) % 2 == 0]
        if even:
            return even[0]
    return fitting[0]


def _vmem_limit(block_bytes, vmem_ceiling):
    return int(min(vmem_ceiling, max(16 * 2**20, 6 * block_bytes + (2 << 20))))


# ---------------------------------------------------------------------------
# Public wrapper.
# ---------------------------------------------------------------------------
@functools.partial(jax.jit, static_argnames=("force_fallback", "force_tile_hw"))
def batchnorm2d(x, gamma, beta, *, force_fallback=False, force_tile_hw=None):
    """Training-mode BatchNorm2d forward. x: (N, C, H, W); gamma/beta: (C,)."""
    N, C, H, W = x.shape
    HW = H * W
    assert C % 8 == 0, "channel count must be a multiple of 8"

    block_budget, vmem_ceiling, multi_tc = _budgets()

    x3 = x.reshape(N, C, HW)                 # free reshape (no transpose)
    g3 = gamma.reshape(1, C, 1).astype(jnp.float32)
    b3 = beta.reshape(1, C, 1).astype(jnp.float32)
    inv_count = 1.0 / float(N * HW)

    tile_c = None if force_fallback else _pick_tile_c(N, C, HW, block_budget,
                                                      multi_tc)

    if tile_c is not None:
        # -------- single-pass path: 1 HBM read + 1 HBM write ---------------
        block_bytes = N * tile_c * HW * 4
        y3 = pl.pallas_call(
            functools.partial(_bn_onepass_kernel, inv_count=inv_count),
            out_shape=jax.ShapeDtypeStruct((N, C, HW), x.dtype),
            grid_spec=pltpu.PrefetchScalarGridSpec(
                num_scalar_prefetch=0,
                grid=(C // tile_c,),
                in_specs=[
                    pl.BlockSpec((N, tile_c, HW), lambda c: (0, c, 0)),
                    pl.BlockSpec((1, tile_c, 1), lambda c: (0, c, 0)),
                    pl.BlockSpec((1, tile_c, 1), lambda c: (0, c, 0)),
                ],
                out_specs=pl.BlockSpec((N, tile_c, HW), lambda c: (0, c, 0)),
            ),
            compiler_params=pltpu.CompilerParams(
                dimension_semantics=("parallel",),
                vmem_limit_bytes=_vmem_limit(block_bytes, vmem_ceiling),
            ),
        )(x3, g3, b3)
        return y3.reshape(N, C, H, W)

    # -------- fallback: spatially tiled two-phase (huge activations) --------
    tile_c = 8
    if force_tile_hw is not None:
        tile_hw = int(force_tile_hw)
    else:
        max_hw = max(128, block_budget // (N * tile_c * 4))
        tile_hw = (max_hw // 128) * 128
    if tile_hw >= HW:
        tile_hw = HW           # whole spatial extent (exempt from 128 rule)
    hw_steps = pl.cdiv(HW, tile_hw)
    block_bytes = N * tile_c * tile_hw * 4
    vmem_limit = _vmem_limit(block_bytes, vmem_ceiling)

    s1, s2 = pl.pallas_call(
        functools.partial(_bn_stats_kernel, tile_hw=tile_hw, hw=HW),
        out_shape=(jax.ShapeDtypeStruct((1, C, 1), jnp.float32),
                   jax.ShapeDtypeStruct((1, C, 1), jnp.float32)),
        grid_spec=pltpu.PrefetchScalarGridSpec(
            num_scalar_prefetch=0,
            grid=(C // tile_c, hw_steps),
            in_specs=[pl.BlockSpec((N, tile_c, tile_hw),
                                   lambda c, h: (0, c, h))],
            out_specs=(pl.BlockSpec((1, tile_c, 1), lambda c, h: (0, c, 0)),
                       pl.BlockSpec((1, tile_c, 1), lambda c, h: (0, c, 0))),
        ),
        compiler_params=pltpu.CompilerParams(
            dimension_semantics=("parallel", "arbitrary"),
            vmem_limit_bytes=vmem_limit,
        ),
    )(x3)

    # Tiny per-channel math (C elements) done in plain XLA.
    mean = s1 * inv_count
    var = jnp.maximum(s2 * inv_count - mean * mean, 0.0)
    scale = lax.rsqrt(var + EPS) * g3
    shift = b3 - mean * scale

    y3 = pl.pallas_call(
        _bn_apply_kernel,
        out_shape=jax.ShapeDtypeStruct((N, C, HW), x.dtype),
        grid_spec=pltpu.PrefetchScalarGridSpec(
            num_scalar_prefetch=0,
            grid=(C // tile_c, hw_steps),
            in_specs=[
                pl.BlockSpec((N, tile_c, tile_hw), lambda c, h: (0, c, h)),
                pl.BlockSpec((1, tile_c, 1), lambda c, h: (0, c, 0)),
                pl.BlockSpec((1, tile_c, 1), lambda c, h: (0, c, 0)),
            ],
            out_specs=pl.BlockSpec((N, tile_c, tile_hw),
                                   lambda c, h: (0, c, h)),
        ),
        compiler_params=pltpu.CompilerParams(
            dimension_semantics=("parallel", "parallel"),
            vmem_limit_bytes=vmem_limit,
        ),
    )(x3, scale, shift)
    return y3.reshape(N, C, H, W)


def batchnorm2d_ref(x, gamma, beta):
    mean = jnp.mean(x, axis=(0, 2, 3), keepdims=True)
    var = jnp.var(x, axis=(0, 2, 3), keepdims=True)
    g = gamma.reshape(1, -1, 1, 1)
    b = beta.reshape(1, -1, 1, 1)
    return (x - mean) * lax.rsqrt(var + EPS) * g + b


if __name__ == "__main__":
    # Small shapes consistent with the module: C must be 96 (BatchNorm2d(96));
    # spatial reduced (14x14 -> HW=196, deliberately NOT a multiple of 128 to
    # exercise the no-pad full-extent lane path).
    N, C, H, W = 1, 96, 14, 14
    key = jax.random.PRNGKey(0)
    x = jax.random.normal(key, (N, C, H, W), dtype=jnp.float32)

    # PyTorch BatchNorm2d default init: weight=1, bias=0 (deterministic).
    gamma = jnp.ones((C,), dtype=jnp.float32)
    beta = jnp.zeros((C,), dtype=jnp.float32)

    ref = batchnorm2d_ref(x, gamma, beta)

    # Fast single-pass path.
    out = jax.block_until_ready(batchnorm2d(x, gamma, beta))
    assert out.shape == (N, C, H, W)
    assert jnp.allclose(out, ref, atol=1e-4, rtol=1e-4)

    # Also exercise the spatially-tiled two-phase fallback (used for very
    # large activations), forcing a small spatial tile with a ragged tail.
    out_fb = jax.block_until_ready(
        batchnorm2d(x, gamma, beta, force_fallback=True, force_tile_hw=128))
    assert jnp.allclose(out_fb, ref, atol=1e-4, rtol=1e-4)

    print("KERNEL_OK")
</pallas_src>

<mosaic_0001>
module attributes {stable_mosaic.version = 11 : i64} {
  func.func @_bn_onepass_kernel(%arg0: i32, %arg1: memref<1x48x196xf32, #tpu.memory_space<vmem>>, %arg2: memref<1x48x1xf32, #tpu.memory_space<vmem>>, %arg3: memref<1x48x1xf32, #tpu.memory_space<vmem>>, %arg4: memref<1x48x196xf32, #tpu.memory_space<vmem>>) attributes {dimension_semantics = [#tpu.dimension_semantics<parallel>], iteration_bounds = array<i64: 2>, scalar_prefetch = 0 : i64, scratch_operands = 0 : i64, tpu.core_type = #tpu.core_type<tc>, window_params = [{transform_indices = @transform_0, window_bounds = array<i64: 1, 48, 196>}, {transform_indices = @transform_1, window_bounds = array<i64: 1, 48, 1>}, {transform_indices = @transform_2, window_bounds = array<i64: 1, 48, 1>}, {transform_indices = @transform_3, window_bounds = array<i64: 1, 48, 196>}]} {
    %c0 = arith.constant 0 : index
    %c0_0 = arith.constant 0 : index
    %c0_1 = arith.constant 0 : index
    %0 = vector.load %arg1[%c0, %c0_0, %c0_1] : memref<1x48x196xf32, #tpu.memory_space<vmem>>, vector<1x48x196xf32>
    %cst = arith.constant dense<0.000000e+00> : vector<48xf32>
    %1 = vector.multi_reduction <add>, %0, %cst [0, 2] : vector<1x48x196xf32> to vector<48xf32>
    %2 = vector.shape_cast %1 : vector<48xf32> to vector<1x48x1xf32>
    %3 = arith.mulf %0, %0 : vector<1x48x196xf32>
    %cst_2 = arith.constant dense<0.000000e+00> : vector<48xf32>
    %4 = vector.multi_reduction <add>, %3, %cst_2 [0, 2] : vector<1x48x196xf32> to vector<48xf32>
    %5 = vector.shape_cast %4 : vector<48xf32> to vector<1x48x1xf32>
    %cst_3 = arith.constant 0.00510204071 : f32
    %6 = vector.broadcast %cst_3 : f32 to vector<1x48x1xf32>
    %7 = arith.mulf %2, %6 : vector<1x48x1xf32>
    %cst_4 = arith.constant 0.00510204071 : f32
    %8 = vector.broadcast %cst_4 : f32 to vector<1x48x1xf32>
    %9 = arith.mulf %5, %8 : vector<1x48x1xf32>
    %10 = arith.mulf %7, %7 : vector<1x48x1xf32>
    %11 = arith.subf %9, %10 : vector<1x48x1xf32>
    %cst_5 = arith.constant 0.000000e+00 : f32
    %12 = vector.broadcast %cst_5 : f32 to vector<1x48x1xf32>
    %13 = arith.maximumf %11, %12 : vector<1x48x1xf32>
    %cst_6 = arith.constant 9.99999974E-6 : f32
    %14 = vector.broadcast %cst_6 : f32 to vector<1x48x1xf32>
    %15 = arith.addf %13, %14 : vector<1x48x1xf32>
    %16 = math.rsqrt %15 : vector<1x48x1xf32>
    %c0_7 = arith.constant 0 : index
    %c0_8 = arith.constant 0 : index
    %c0_9 = arith.constant 0 : index
    %17 = vector.load %arg2[%c0_7, %c0_8, %c0_9] : memref<1x48x1xf32, #tpu.memory_space<vmem>>, vector<1x48x1xf32>
    %18 = arith.mulf %16, %17 : vector<1x48x1xf32>
    %c0_10 = arith.constant 0 : index
    %c0_11 = arith.constant 0 : index
    %c0_12 = arith.constant 0 : index
    %19 = vector.load %arg3[%c0_10, %c0_11, %c0_12] : memref<1x48x1xf32, #tpu.memory_space<vmem>>, vector<1x48x1xf32>
    %20 = arith.mulf %7, %18 : vector<1x48x1xf32>
    %21 = arith.subf %19, %20 : vector<1x48x1xf32>
    %22 = vector.broadcast %18 : vector<1x48x1xf32> to vector<1x48x196xf32>
    %23 = arith.mulf %0, %22 : vector<1x48x196xf32>
    %24 = vector.broadcast %21 : vector<1x48x1xf32> to vector<1x48x196xf32>
    %25 = arith.addf %23, %24 : vector<1x48x196xf32>
    %c0_13 = arith.constant 0 : index
    %c0_14 = arith.constant 0 : index
    %c0_15 = arith.constant 0 : index
    %26 = vector.load %arg4[%c0_13, %c0_14, %c0_15] : memref<1x48x196xf32, #tpu.memory_space<vmem>>, vector<1x48x196xf32>
    tpu.vector_store %arg4[%c0_13, %c0_14, %c0_15], %25 {strides = array<i32>} : memref<1x48x196xf32, #tpu.memory_space<vmem>>, vector<1x48x196xf32>,
    return
  }
  func.func @transform_0(%arg0: i32) -> (i32, i32, i32) {
    %c0_i32 = arith.constant 0 : i32
    %c0_i32_0 = arith.constant 0 : i32
    %c0_i32_1 = arith.constant 0 : i32
    return %c0_i32, %arg0, %c0_i32_0 : i32, i32, i32
  }
  func.func @transform_1(%arg0: i32) -> (i32, i32, i32) {
    %c0_i32 = arith.constant 0 : i32
    %c0_i32_0 = arith.constant 0 : i32
    %c0_i32_1 = arith.constant 0 : i32
    return %c0_i32, %arg0, %c0_i32_0 : i32, i32, i32
  }
  func.func @transform_2(%arg0: i32) -> (i32, i32, i32) {
    %c0_i32 = arith.constant 0 : i32
    %c0_i32_0 = arith.constant 0 : i32
    %c0_i32_1 = arith.constant 0 : i32
    return %c0_i32, %arg0, %c0_i32_0 : i32, i32, i32
  }
  func.func @transform_3(%arg0: i32) -> (i32, i32, i32) {
    %c0_i32 = arith.constant 0 : i32
    %c0_i32_0 = arith.constant 0 : i32
    %c0_i32_1 = arith.constant 0 : i32
    return %c0_i32, %arg0, %c0_i32_0 : i32, i32, i32
  }
}

</mosaic_0001>

<llo_original>
// kernel: batchnorm2d.1
$region0: #{batchnorm2d.1}
  #allocation0 [shape = 'u32[]', space=smem, size = 0x4, offset = 0x4, fixed_abs, tag = 'smem constant byte address 0x4 - core index']
  #allocation1 [shape = 'u32[144,128]{1,0:T(1,128)}', space=vmem, size = 0x12000, scoped, tag = 'internal scratch']
  %s0 = inlined_call_operand.vmem [shape: f32[1,96,196], index: 0, kind: input, shape index: {}]
  %s1 = inlined_call_operand.vmem [shape: f32[1,96,1], index: 1, kind: input, shape index: {}]
  %s2 = inlined_call_operand.vmem [shape: f32[1,96,1], index: 2, kind: input, shape index: {}]
  %s3 = inlined_call_operand.vmem [shape: f32[1,96,196], index: 3, kind: output, shape index: {}]
  %s4 = sld [smem:[#allocation0]]
  $region45: #{batchnorm2d.1} parent=0
    _
  %s6 = ssub.s32 1, %s4
  %s7 = scalar_select 0, %s6, %s4
  loop: start=0, step=1, limit=4
  $region2: #{batchnorm2d.1} parent=0 // loop_pre_header
    _
  $region3: #{batchnorm2d.1} parent=0 // loop_header
    %s9 = sphi 0, %s13
    %p10 = scmp.ge.s32.totalorder %s9, 4
    %s19 = sphi 0, %s21
    %s22 = sphi 0, %s19
    %s23 = sphi 0, %s22
    %s39 = sphi 0, %s23
    %s45 = sphi 0, %s47
    %s48 = sphi 0, %s45
    %s49 = sphi 0, %s48
    %s65 = sphi 0, %s49
    %s71 = sphi 0, %s73
    %s74 = sphi 0, %s71
    %s75 = sphi 0, %s74
    %s91 = sphi 0, %s75
    %s97 = sphi 0, %s99
    %s100 = sphi 0, %s97
    %s101 = sphi 0, %s100
    %s117 = sphi 0, %s101
  $region4: #{batchnorm2d.1} parent=0 // loop_header_branch
    %12 = sbr.rel (%p10) target = $region8
  $region5: #{batchnorm2d.1} parent=0 // loop_body
    %s14 = ssub.s32 %s9, 1
    %s15 = ssub.s32 %s9, 2
    %s16 = sadd.s32 %s9, 1
    %s17 = ssub.s32 %s9, %s16
    %p18 = scmp.eq.s32.totalorder %s17, 0
    %s20 = sadd.s32 %s19, 1
    %s21 = scalar_select %p18, %s19, %s20
    %p24 = pneg %p18
    %p25 = scmp.eq.s32.totalorder %s9, 1
    %p26 = por %p24, %p25
    %p27 = scmp.ne.s32.totalorder %s19, %s22
    %p28 = scmp.eq.s32.totalorder %s9, 0
    %p29 = por %p27, %p28
    %p30 = scmp.ne.s32.totalorder %s19, %s22
    %p31 = scmp.eq.s32.totalorder %s14, 1
    %p32 = por %p30, %p31
    %p33 = scmp.ne.s32.totalorder %s22, %s23
    %p34 = scmp.eq.s32.totalorder %s14, 0
    %p35 = por %p33, %p34
    %p36 = scmp.ne.s32.totalorder %s22, %s23
    %p37 = scmp.eq.s32.totalorder %s15, 1
    %p38 = por %p36, %p37
    %p40 = scmp.ne.s32.totalorder %s23, %s39
    %p41 = scmp.eq.s32.totalorder %s15, 0
    %p42 = por %p40, %p41
    %s43 = ssub.s32 %s9, %s16
    %p44 = scmp.eq.s32.totalorder %s43, 0
    %s46 = sadd.s32 %s45, 1
    %s47 = scalar_select %p44, %s45, %s46
    %p50 = pneg %p44
    %p51 = scmp.eq.s32.totalorder %s9, 1
    %p52 = por %p50, %p51
    %p53 = scmp.ne.s32.totalorder %s45, %s48
    %p54 = scmp.eq.s32.totalorder %s9, 0
    %p55 = por %p53, %p54
    %p56 = scmp.ne.s32.totalorder %s45, %s48
    %p57 = scmp.eq.s32.totalorder %s14, 1
    %p58 = por %p56, %p57
    %p59 = scmp.ne.s32.totalorder %s48, %s49
    %p60 = scmp.eq.s32.totalorder %s14, 0
    %p61 = por %p59, %p60
    %p62 = scmp.ne.s32.totalorder %s48, %s49
    %p63 = scmp.eq.s32.totalorder %s15, 1
    %p64 = por %p62, %p63
    %p66 = scmp.ne.s32.totalorder %s49, %s65
    %p67 = scmp.eq.s32.totalorder %s15, 0
    %p68 = por %p66, %p67
    %s69 = ssub.s32 %s9, %s16
    %p70 = scmp.eq.s32.totalorder %s69, 0
    %s72 = sadd.s32 %s71, 1
    %s73 = scalar_select %p70, %s71, %s72
    %p76 = pneg %p70
    %p77 = scmp.eq.s32.totalorder %s9, 1
    %p78 = por %p76, %p77
    %p79 = scmp.ne.s32.totalorder %s71, %s74
    %p80 = scmp.eq.s32.totalorder %s9, 0
    %p81 = por %p79, %p80
    %p82 = scmp.ne.s32.totalorder %s71, %s74
    %p83 = scmp.eq.s32.totalorder %s14, 1
    %p84 = por %p82, %p83
    %p85 = scmp.ne.s32.totalorder %s74, %s75
    %p86 = scmp.eq.s32.totalorder %s14, 0
    %p87 = por %p85, %p86
    %p88 = scmp.ne.s32.totalorder %s74, %s75
    %p89 = scmp.eq.s32.totalorder %s15, 1
    %p90 = por %p88, %p89
    %p92 = scmp.ne.s32.totalorder %s75, %s91
    %p93 = scmp.eq.s32.totalorder %s15, 0
    %p94 = por %p92, %p93
    %s95 = ssub.s32 %s9, %s16
    %p96 = scmp.eq.s32.totalorder %s95, 0
    %s98 = sadd.s32 %s97, 1
    %s99 = scalar_select %p96, %s97, %s98
    %p102 = pneg %p96
    %p103 = scmp.eq.s32.totalorder %s9, 1
    %p104 = por %p102, %p103
    %p105 = scmp.ne.s32.totalorder %s97, %s100
    %p106 = scmp.eq.s32.totalorder %s9, 0
    %p107 = por %p105, %p106
    %p108 = scmp.ne.s32.totalorder %s97, %s100
    %p109 = scmp.eq.s32.totalorder %s14, 1
    %p110 = por %p108, %p109
    %p111 = scmp.ne.s32.totalorder %s100, %s101
    %p112 = scmp.eq.s32.totalorder %s14, 0
    %p113 = por %p111, %p112
    %p114 = scmp.ne.s32.totalorder %s100, %s101
    %p115 = scmp.eq.s32.totalorder %s15, 1
    %p116 = por %p114, %p115
    %p118 = scmp.ne.s32.totalorder %s101, %s117
    %p119 = scmp.eq.s32.totalorder %s15, 0
    %p120 = por %p118, %p119
    %p121 = scmp.le.s32.totalorder 1, %s9
    %p122 = scmp.lt.s32.totalorder %s9, 3
    %p123 = pnand %p121, %p122
    %p124 = pneg %p123
    // Predicated region
    $region9: #{batchnorm2d.1} parent=5 // pred_check
      _
    $region10: #{batchnorm2d.1} parent=5 // pred_check_branch
      %126 = sbr.rel (%p123) target = $region12
    $region11: #{batchnorm2d.1} parent=5 // pred_region
      %s127 = ssub.s32 %s9, 1
    $region12: #{batchnorm2d.1} parent=5 // pred_fallthru
      _
    %p128 = scmp.lt.s32.totalorder %s9, 2
    // Predicated region
    $region13: #{batchnorm2d.1} parent=5 // pred_check
      %p129 = pneg %p128
    $region14: #{batchnorm2d.1} parent=5 // pred_check_branch
      %131 = sbr.rel (%p129) target = $region16
    $region15: #{batchnorm2d.1} parent=5 // pred_region
      // Predicated region
      $region17: #{batchnorm2d.1} parent=15 // pred_check
        %p132 = pneg %p29
      $region18: #{batchnorm2d.1} parent=15 // pred_check_branch
        %134 = sbr.rel (%p132) target = $region20
      $region19: #{batchnorm2d.1} parent=15 // pred_region
        %s135 = smul.u32 6, %s9
        %p136 = scmp.lt.s32.totalorder %s135, 11
        %s137 = scalar_select %p136, %s135, 11
        %s138 = smul.addr %s137, 2
        %s139 = smul.addr %s138, 8
        %s140 = scalar_lea.vmem %s0, %s139
        %s141 = smul.u32 6, %s9
      $region20: #{batchnorm2d.1} parent=15 // pred_fallthru
        _
      // Predicated region
      $region21: #{batchnorm2d.1} parent=15 // pred_check
        %p142 = pneg %p55
      $region22: #{batchnorm2d.1} parent=15 // pred_check_branch
        %144 = sbr.rel (%p142) target = $region24
      $region23: #{batchnorm2d.1} parent=15 // pred_region
        %s145 = smul.u32 6, %s9
        %p146 = scmp.lt.s32.totalorder %s145, 11
        %s147 = scalar_select %p146, %s145, 11
        %s148 = smul.addr %s147, 8
        %s149 = scalar_lea.vmem %s1, %s148
        %s150 = smul.u32 6, %s9
      $region24: #{batchnorm2d.1} parent=15 // pred_fallthru
        _
      // Predicated region
      $region25: #{batchnorm2d.1} parent=15 // pred_check
        %p151 = pneg %p81
      $region26: #{batchnorm2d.1} parent=15 // pred_check_branch
        %153 = sbr.rel (%p151) target = $region28
      $region27: #{batchnorm2d.1} parent=15 // pred_region
        %s154 = smul.u32 6, %s9
        %p155 = scmp.lt.s32.totalorder %s154, 11
        %s156 = scalar_select %p155, %s154, 11
        %s157 = smul.addr %s156, 8
        %s158 = scalar_lea.vmem %s2, %s157
        %s159 = smul.u32 6, %s9
      $region28: #{batchnorm2d.1} parent=15 // pred_fallthru
        _
    $region16: #{batchnorm2d.1} parent=5 // pred_fallthru
      _
    %p160 = scmp.le.s32.totalorder 1, %s9
    %p161 = scmp.lt.s32.totalorder %s9, 3
    %p162 = pnand %p160, %p161
    %p163 = pneg %p162
    // Predicated region
    $region29: #{batchnorm2d.1} parent=5 // pred_check
      _
    $region30: #{batchnorm2d.1} parent=5 // pred_check_branch
      %165 = sbr.rel (%p162) target = $region32
    $region31: #{batchnorm2d.1} parent=5 // pred_region
      %s166 = ssub.s32 %s9, 1
      %s167 = smul.u32 6, %s14
      %p168 = scmp.lt.s32.totalorder %s167, 11
      %s169 = scalar_select %p168, %s167, 11
      %s170 = smul.addr %s169, 2
      %s171 = smul.addr %s170, 8
      %s172 = scalar_lea.vmem %s0, %s171
      %p173 = pneg %p35
      %p174 = pneg %p32
      %s175 = smul.u32 6, %s14
      %p176 = scmp.lt.s32.totalorder %s175, 11
      %s177 = scalar_select %p176, %s175, 11
      %s178 = smul.addr %s177, 8
      %s179 = scalar_lea.vmem %s1, %s178
      %p180 = pneg %p61
      %p181 = pneg %p58
      %s182 = smul.u32 6, %s14
      %p183 = scmp.lt.s32.totalorder %s182, 11
      %s184 = scalar_select %p183, %s182, 11
      %s185 = smul.addr %s184, 8
      %s186 = scalar_lea.vmem %s2, %s185
      %p187 = pneg %p87
      %p188 = pneg %p84
      %p189 = pneg %p113
      %p190 = pneg %p110
      %s191 = smul.u32 6, %s14
      %p192 = scmp.lt.s32.totalorder %s191, 11
      %s193 = scalar_select %p192, %s191, 11
      %s194 = smul.addr %s193, 2
      %s195 = smul.addr %s194, 8
      %s196 = scalar_lea.vmem %s3, %s195
      %s197 = smul.u32 6, %s14
      %p198 = scmp.lt.s32.totalorder %s197, 11
      %s199 = scalar_select %p198, %s197, 11
      %s200 = smul.addr %s199, 2
      %s201 = smul.addr %s200, 8
      %s202 = scalar_lea.vmem %s0, %s201
      %s203 = smul.u32 6, %s14
      %s204 = smul.u32 6, %s14
      %p205 = scmp.lt.s32.totalorder %s204, 11
      %s206 = scalar_select %p205, %s204, 11
      %s207 = smul.addr %s206, 8
      %s208 = scalar_lea.vmem %s1, %s207
      %s209 = smul.u32 6, %s14
      %s210 = smul.u32 6, %s14
      %p211 = scmp.lt.s32.totalorder %s210, 11
      %s212 = scalar_select %p211, %s210, 11
      %s213 = smul.addr %s212, 8
      %s214 = scalar_lea.vmem %s2, %s213
      %s215 = smul.u32 6, %s14
      %s216 = smul.u32 6, %s14
      %p217 = scmp.lt.s32.totalorder %s216, 11
      %s218 = scalar_select %p217, %s216, 11
      %s219 = smul.addr %s218, 2
      %s220 = smul.addr %s219, 8
      %s221 = scalar_lea.vmem %s3, %s220
      %s222 = smul.u32 6, %s14
      %v223 = vld [vmem:[%s202] sm:$0xff]
      %v224 = vld [vmem:[%s202 + $0x8] sm:$0xff]
      %v225 = vld [vmem:[%s202 + $0x10] sm:$0xff]
      %v226 = vld [vmem:[%s202 + $0x18] sm:$0xff]
      %v227 = vld [vmem:[%s202 + $0x20] sm:$0xff]
      %v228 = vld [vmem:[%s202 + $0x28] sm:$0xff]
      %v229 = vld [vmem:[%s202 + $0x30] sm:$0xff]
      %v230 = vld [vmem:[%s202 + $0x38] sm:$0xff]
      %v231 = vld [vmem:[%s202 + $0x40] sm:$0xff]
      %v232 = vld [vmem:[%s202 + $0x48] sm:$0xff]
      %v233 = vld [vmem:[%s202 + $0x50] sm:$0xff]
      %v234 = vld [vmem:[%s202 + $0x58] sm:$0xff]
      %vm235 = vcmask 556032
      %v236 = vsel %vm235, %v224, 0.0
      %v237 = vadd.f32 %v223, %v236
      %238 = vadd.xlane.f32.xlu0 %v237
      %v239 = vpop.xlane.xlu0 %238
      %v240 = vsel %vm235, %v226, 0.0
      %v241 = vadd.f32 %v225, %v240
      %242 = vadd.xlane.f32.xlu0 %v241
      %v243 = vpop.xlane.xlu0 %242
      %v244 = vsel %vm235, %v228, 0.0
      %v245 = vadd.f32 %v227, %v244
      %246 = vadd.xlane.f32.xlu0 %v245
      %v247 = vpop.xlane.xlu0 %246
      %v248 = vsel %vm235, %v230, 0.0
      %v249 = vadd.f32 %v229, %v248
      %250 = vadd.xlane.f32.xlu0 %v249
      %v251 = vpop.xlane.xlu0 %250
      %v252 = vsel %vm235, %v232, 0.0
      %v253 = vadd.f32 %v231, %v252
      %254 = vadd.xlane.f32.xlu0 %v253
      %v255 = vpop.xlane.xlu0 %254
      %v256 = vsel %vm235, %v234, 0.0
      %v257 = vadd.f32 %v233, %v256
      %258 = vadd.xlane.f32.xlu0 %v257
      %v259 = vpop.xlane.xlu0 %258
      %v260 = vmul.f32 %v223, %v223
      %v261 = vmul.f32 %v224, %v224
      %v262 = vmul.f32 %v225, %v225
      %v263 = vmul.f32 %v226, %v226
      %v264 = vmul.f32 %v227, %v227
      %v265 = vmul.f32 %v228, %v228
      %v266 = vmul.f32 %v229, %v229
      %v267 = vmul.f32 %v230, %v230
      %v268 = vmul.f32 %v231, %v231
      %v269 = vmul.f32 %v232, %v232
      %v270 = vmul.f32 %v233, %v233
      %v271 = vmul.f32 %v234, %v234
      %v272 = vsel %vm235, %v261, 0.0
      %v273 = vadd.f32 %v260, %v272
      %274 = vadd.xlane.f32.xlu0 %v273
      %v275 = vpop.xlane.xlu0 %274
      %v276 = vsel %vm235, %v263, 0.0
      %v277 = vadd.f32 %v262, %v276
      %278 = vadd.xlane.f32.xlu0 %v277
      %v279 = vpop.xlane.xlu0 %278
      %v280 = vsel %vm235, %v265, 0.0
      %v281 = vadd.f32 %v264, %v280
      %282 = vadd.xlane.f32.xlu0 %v281
      %v283 = vpop.xlane.xlu0 %282
      %v284 = vsel %vm235, %v267, 0.0
      %v285 = vadd.f32 %v266, %v284
      %286 = vadd.xlane.f32.xlu0 %v285
      %v287 = vpop.xlane.xlu0 %286
      %v288 = vsel %vm235, %v269, 0.0
      %v289 = vadd.f32 %v268, %v288
      %290 = vadd.xlane.f32.xlu0 %v289
      %v291 = vpop.xlane.xlu0 %290
      %v292 = vsel %vm235, %v271, 0.0
      %v293 = vadd.f32 %v270, %v292
      %294 = vadd.xlane.f32.xlu0 %v293
      %v295 = vpop.xlane.xlu0 %294
      %v296 = vmul.f32 %v239, 0.0051020407
      %v297 = vmul.f32 %v243, 0.0051020407
      %v298 = vmul.f32 %v247, 0.0051020407
      %v299 = vmul.f32 %v251, 0.0051020407
      %v300 = vmul.f32 %v255, 0.0051020407
      %v301 = vmul.f32 %v259, 0.0051020407
      %v302 = vmul.f32 %v275, 0.0051020407
      %v303 = vmul.f32 %v279, 0.0051020407
      %v304 = vmul.f32 %v283, 0.0051020407
      %v305 = vmul.f32 %v287, 0.0051020407
      %v306 = vmul.f32 %v291, 0.0051020407
      %v307 = vmul.f32 %v295, 0.0051020407
      %v308 = vmul.f32 %v296, %v296
      %v309 = vmul.f32 %v297, %v297
      %v310 = vmul.f32 %v298, %v298
      %v311 = vmul.f32 %v299, %v299
      %v312 = vmul.f32 %v300, %v300
      %v313 = vmul.f32 %v301, %v301
      %v314 = vsub.f32 %v302, %v308
      %v315 = vsub.f32 %v303, %v309
      %v316 = vsub.f32 %v304, %v310
      %v317 = vsub.f32 %v305, %v311
      %v318 = vsub.f32 %v306, %v312
      %v319 = vsub.f32 %v307, %v313
      %v320 = vmax.f32 %v314, 0.0
      %v321 = vmax.f32 %v315, 0.0
      %v322 = vmax.f32 %v316, 0.0
      %v323 = vmax.f32 %v317, 0.0
      %v324 = vmax.f32 %v318, 0.0
      %v325 = vmax.f32 %v319, 0.0
      %v326 = vadd.f32 %v320, 1e-05
      %v327 = vadd.f32 %v321, 1e-05
      %v328 = vadd.f32 %v322, 1e-05
      %v329 = vadd.f32 %v323, 1e-05
      %v330 = vadd.f32 %v324, 1e-05
      %v331 = vadd.f32 %v325, 1e-05
      %v332 = vrsqrt.pop %v326
      %v333 = vrsqrt.pop %v327
      %v334 = vrsqrt.pop %v328
      %v335 = vrsqrt.pop %v329
      %v336 = vrsqrt.pop %v330
      %v337 = vrsqrt.pop %v331
      %v338 = vld [vmem:[%s208] sm:$0xff]
      %v339 = vld [vmem:[%s208 + $0x8] sm:$0xff]
      %v340 = vld [vmem:[%s208 + $0x10] sm:$0xff]
      %v341 = vld [vmem:[%s208 + $0x18] sm:$0xff]
      %v342 = vld [vmem:[%s208 + $0x20] sm:$0xff]
      %v343 = vld [vmem:[%s208 + $0x28] sm:$0xff]
      %v344 = vmul.f32 %v332, %v338
      %v345 = vmul.f32 %v333, %v339
      %v346 = vmul.f32 %v334, %v340
      %v347 = vmul.f32 %v335, %v341
      %v348 = vmul.f32 %v336, %v342
      %v349 = vmul.f32 %v337, %v343
      %v350 = vld [vmem:[%s214] sm:$0xff]
      %v351 = vld [vmem:[%s214 + $0x8] sm:$0xff]
      %v352 = vld [vmem:[%s214 + $0x10] sm:$0xff]
      %v353 = vld [vmem:[%s214 + $0x18] sm:$0xff]
      %v354 = vld [vmem:[%s214 + $0x20] sm:$0xff]
      %v355 = vld [vmem:[%s214 + $0x28] sm:$0xff]
      %v356 = vmul.f32 %v296, %v344
      %v357 = vmul.f32 %v297, %v345
      %v358 = vmul.f32 %v298, %v346
      %v359 = vmul.f32 %v299, %v347
      %v360 = vmul.f32 %v300, %v348
      %v361 = vmul.f32 %v301, %v349
      %v362 = vsub.f32 %v350, %v356
      %v363 = vsub.f32 %v351, %v357
      %v364 = vsub.f32 %v352, %v358
      %v365 = vsub.f32 %v353, %v359
      %v366 = vsub.f32 %v354, %v360
      %v367 = vsub.f32 %v355, %v361
      %369 = vset.pattern.permute.xlu0 0
      %370 = vperm.xlu0 %369, %v344
      %v371 = vpop.permute.xlu0 %370
      %374 = vset.pattern.permute.xlu0 0
      %375 = vperm.xlu0 %374, %v345
      %v376 = vpop.permute.xlu0 %375
      %379 = vset.pattern.permute.xlu0 0
      %380 = vperm.xlu0 %379, %v346
      %v381 = vpop.permute.xlu0 %380
      %384 = vset.pattern.permute.xlu0 0
      %385 = vperm.xlu0 %384, %v347
      %v386 = vpop.permute.xlu0 %385
      %389 = vset.pattern.permute.xlu0 0
      %390 = vperm.xlu0 %389, %v348
      %v391 = vpop.permute.xlu0 %390
      %394 = vset.pattern.permute.xlu0 0
      %395 = vperm.xlu0 %394, %v349
      %v396 = vpop.permute.xlu0 %395
      %v398 = vmul.f32 %v223, %v371
      %v399 = vmul.f32 %v224, %v371
      %v400 = vmul.f32 %v225, %v376
      %v401 = vmul.f32 %v226, %v376
      %v402 = vmul.f32 %v227, %v381
      %v403 = vmul.f32 %v228, %v381
      %v404 = vmul.f32 %v229, %v386
      %v405 = vmul.f32 %v230, %v386
      %v406 = vmul.f32 %v231, %v391
      %v407 = vmul.f32 %v232, %v391
      %v408 = vmul.f32 %v233, %v396
      %v409 = vmul.f32 %v234, %v396
      %411 = vset.pattern.permute.xlu0 0
      %412 = vperm.xlu0 %411, %v362
      %v413 = vpop.permute.xlu0 %412
      %416 = vset.pattern.permute.xlu0 0
      %417 = vperm.xlu0 %416, %v363
      %v418 = vpop.permute.xlu0 %417
      %421 = vset.pattern.permute.xlu0 0
      %422 = vperm.xlu0 %421, %v364
      %v423 = vpop.permute.xlu0 %422
      %426 = vset.pattern.permute.xlu0 0
      %427 = vperm.xlu0 %426, %v365
      %v428 = vpop.permute.xlu0 %427
      %431 = vset.pattern.permute.xlu0 0
      %432 = vperm.xlu0 %431, %v366
      %v433 = vpop.permute.xlu0 %432
      %436 = vset.pattern.permute.xlu0 0
      %437 = vperm.xlu0 %436, %v367
      %v438 = vpop.permute.xlu0 %437
      %v440 = vadd.f32 %v398, %v413
      %v441 = vadd.f32 %v399, %v413
      %v442 = vadd.f32 %v400, %v418
      %v443 = vadd.f32 %v401, %v418
      %v444 = vadd.f32 %v402, %v423
      %v445 = vadd.f32 %v403, %v423
      %v446 = vadd.f32 %v404, %v428
      %v447 = vadd.f32 %v405, %v428
      %v448 = vadd.f32 %v406, %v433
      %v449 = vadd.f32 %v407, %v433
      %v450 = vadd.f32 %v408, %v438
      %v451 = vadd.f32 %v409, %v438
      %452 = vst [vmem:[%s221] sm:$0xff] %v440
      %453 = vst.msk [vmem:[%s221 + $0x8] sm:$0xff] %vm235, %v441
      %454 = vst [vmem:[%s221 + $0x10] sm:$0xff] %v442
      %455 = vst.msk [vmem:[%s221 + $0x18] sm:$0xff] %vm235, %v443
      %456 = vst [vmem:[%s221 + $0x20] sm:$0xff] %v444
      %457 = vst.msk [vmem:[%s221 + $0x28] sm:$0xff] %vm235, %v445
      %458 = vst [vmem:[%s221 + $0x30] sm:$0xff] %v446
      %459 = vst.msk [vmem:[%s221 + $0x38] sm:$0xff] %vm235, %v447
      %460 = vst [vmem:[%s221 + $0x40] sm:$0xff] %v448
      %461 = vst.msk [vmem:[%s221 + $0x48] sm:$0xff] %vm235, %v449
      %462 = vst [vmem:[%s221 + $0x50] sm:$0xff] %v450
      %463 = vst.msk [vmem:[%s221 + $0x58] sm:$0xff] %vm235, %v451
      %s464 = smul.u32 6, %s14
      %p465 = scmp.lt.s32.totalorder %s464, 11
      %s466 = scalar_select %p465, %s464, 11
      %s467 = smul.addr %s466, 2
      %s468 = smul.addr %s467, 8
      %s469 = scalar_lea.vmem %s3, %s468
      // Predicated region
      $region33: #{batchnorm2d.1} parent=31 // pred_check
        %p470 = pneg %p110
      $region34: #{batchnorm2d.1} parent=31 // pred_check_branch
        %472 = sbr.rel (%p470) target = $region36
      $region35: #{batchnorm2d.1} parent=31 // pred_region
        %s473 = smul.u32 6, %s14
      $region36: #{batchnorm2d.1} parent=31 // pred_fallthru
        _
    $region32: #{batchnorm2d.1} parent=5 // pred_fallthru
      _
    %p474 = scmp.le.s32.totalorder 2, %s9
    // Predicated region
    $region37: #{batchnorm2d.1} parent=5 // pred_check
      %p475 = pneg %p474
    $region38: #{batchnorm2d.1} parent=5 // pred_check_branch
      %477 = sbr.rel (%p475) target = $region40
    $region39: #{batchnorm2d.1} parent=5 // pred_region
      %s478 = ssub.s32 %s9, 2
      // Predicated region
      $region41: #{batchnorm2d.1} parent=39 // pred_check
        %p479 = pneg %p116
      $region42: #{batchnorm2d.1} parent=39 // pred_check_branch
        %481 = sbr.rel (%p479) target = $region44
      $region43: #{batchnorm2d.1} parent=39 // pred_region
        %s482 = smul.u32 6, %s15
        %p483 = scmp.lt.s32.totalorder %s482, 11
        %s484 = scalar_select %p483, %s482, 11
        %s485 = smul.addr %s484, 2
        %s486 = smul.addr %s485, 8
        %s487 = scalar_lea.vmem %s3, %s486
      $region44: #{batchnorm2d.1} parent=39 // pred_fallthru
        _
    $region40: #{batchnorm2d.1} parent=5 // pred_fallthru
      _
  $region6: #{batchnorm2d.1} parent=0 // loop_footer
    %s13 = sadd.s32 1, %s9
  $region7: #{batchnorm2d.1} parent=0 // loop_footer_branch
    %8 = sbr.rel target = $region3
  $region8: #{batchnorm2d.1} parent=0 // loop_exit
    _

</llo_original>
